<compile_context>
chip_gen: v5e
topology: v5e:2x2
jax: 0.10.0
libtpu: 0.0.40
codegen_flags: <defaults>
</compile_context>

<pallas_src>
import jax
import jax.numpy as jnp
import numpy as np
from jax import lax
from jax.experimental import pallas as pl
from jax.experimental.pallas import tpu as pltpu


def _adaln_zero3d_kernel(x_ref, c_ref,
                         w_shift_ref, w_scale_ref, w_gate_ref, w_net_ref,
                         b_shift_ref, b_scale_ref, b_gate_ref, b_net_ref,
                         o_ref):
    # x_ref / c_ref / o_ref : (1, C, TS)  -- C on sublanes, TS (mult. of 128) on lanes
    # w_* : (C, C),  b_* : (C, 1)
    x = x_ref[0].astype(jnp.float32)                  # (C, TS)
    a = jax.nn.silu(c_ref[0].astype(jnp.float32))     # SiLU(c), EUP path

    def cmm(w_ref, b_ref):
        # (C, C) @ (C, TS) -> (C, TS); spatial on lanes -> lane-dense result.
        return lax.dot_general(
            w_ref[...].astype(jnp.float32), a,
            dimension_numbers=(((1,), (0,)), ((), ())),
            preferred_element_type=jnp.float32) + b_ref[...].astype(jnp.float32)

    shift = cmm(w_shift_ref, b_shift_ref)
    scale = cmm(w_scale_ref, b_scale_ref)
    gate = cmm(w_gate_ref, b_gate_ref)

    # modulate + SiLU + 1x1x1 net conv + gated residual, all on the same tile.
    m = jax.nn.silu(x * (1.0 + scale) + shift)
    net = lax.dot_general(
        w_net_ref[...].astype(jnp.float32), m,
        dimension_numbers=(((1,), (0,)), ((), ())),
        preferred_element_type=jnp.float32) + b_net_ref[...].astype(jnp.float32)

    o_ref[0] = (x + gate * net).astype(o_ref.dtype)


def adaln_zero3d(x, c, w_ada, b_ada, w_net, b_net, *, spatial_tile=None):
    """Fused AdaLN_Zero3D forward.

    x, c   : (N, C, T, H, W)   (c may have broadcastable spatial dims)
    w_ada  : (3C, C, 1, 1, 1), b_ada : (3C,)
    w_net  : (C,  C, 1, 1, 1), b_net : (C,)
    returns: (N, C, T, H, W), same dtype as x.
    """
    n, ch, t, h, w = x.shape
    if c.shape != x.shape:
        # 1x1x1 conv is pointwise, so broadcasting c up-front is equivalent
        # to broadcasting after the conv (as modulate() would).
        c = jnp.broadcast_to(c, x.shape)

    s = t * h * w
    x_flat = x.reshape(n, ch, s)
    c_flat = c.reshape(n, ch, s)

    # Split the 3C modulation conv into shift / scale / gate slabs (chunk order
    # of torch .chunk(3, dim=1)) so the kernel never slices matmul results.
    w_ada2 = w_ada.reshape(3 * ch, ch)
    w_shift, w_scale, w_gate = w_ada2[:ch], w_ada2[ch:2 * ch], w_ada2[2 * ch:]
    b_shift = b_ada[:ch].reshape(ch, 1)
    b_scale = b_ada[ch:2 * ch].reshape(ch, 1)
    b_gate = b_ada[2 * ch:].reshape(ch, 1)
    w_net2 = w_net.reshape(ch, ch)
    b_net2 = b_net.reshape(ch, 1)

    # Lane-dense spatial tile: multiple of 128, sized so a (C, TS) f32 tile is
    # ~2 MiB (comfortably double-buffered on v5e/v6e/v7x default VMEM scopes).
    s_r128 = pl.cdiv(s, 128) * 128
    if spatial_tile is None:
        cap = max(128, ((2 * 1024 * 1024) // (4 * ch)) // 128 * 128)
        spatial_tile = min(cap, s_r128, 4096)
    ts = spatial_tile
    s_pad = pl.cdiv(s, ts) * ts
    if s_pad != s:
        pad = s_pad - s
        x_flat = jnp.pad(x_flat, ((0, 0), (0, 0), (0, pad)))
        c_flat = jnp.pad(c_flat, ((0, 0), (0, 0), (0, pad)))

    grid = (n, s_pad // ts)

    out = pl.pallas_call(
        _adaln_zero3d_kernel,
        out_shape=jax.ShapeDtypeStruct((n, ch, s_pad), x.dtype),
        grid_spec=pltpu.PrefetchScalarGridSpec(
            num_scalar_prefetch=0,
            grid=grid,
            in_specs=[
                pl.BlockSpec((1, ch, ts), lambda b, si: (b, 0, si)),   # x tile
                pl.BlockSpec((1, ch, ts), lambda b, si: (b, 0, si)),   # c tile
                pl.BlockSpec((ch, ch), lambda b, si: (0, 0)),          # w_shift
                pl.BlockSpec((ch, ch), lambda b, si: (0, 0)),          # w_scale
                pl.BlockSpec((ch, ch), lambda b, si: (0, 0)),          # w_gate
                pl.BlockSpec((ch, ch), lambda b, si: (0, 0)),          # w_net
                pl.BlockSpec((ch, 1), lambda b, si: (0, 0)),           # b_shift
                pl.BlockSpec((ch, 1), lambda b, si: (0, 0)),           # b_scale
                pl.BlockSpec((ch, 1), lambda b, si: (0, 0)),           # b_gate
                pl.BlockSpec((ch, 1), lambda b, si: (0, 0)),           # b_net
            ],
            out_specs=pl.BlockSpec((1, ch, ts), lambda b, si: (b, 0, si)),
        ),
        compiler_params=pltpu.CompilerParams(
            dimension_semantics=("parallel", "parallel")),
    )(x_flat, c_flat, w_shift, w_scale, w_gate, w_net2,
      b_shift, b_scale, b_gate, b_net2)

    if s_pad != s:
        out = out[:, :, :s]
    return out.reshape(n, ch, t, h, w)


def _reference(x, c, w_ada, b_ada, w_net, b_net):
    ch = x.shape[1]
    if c.shape != x.shape:
        c = jnp.broadcast_to(c, x.shape)
    a = jax.nn.silu(c)
    mod = (jnp.einsum('oc,ncthw->nothw', w_ada.reshape(3 * ch, ch), a)
           + b_ada.reshape(1, -1, 1, 1, 1))
    shift, scale, gate = jnp.split(mod, 3, axis=1)
    m = jax.nn.silu(x * (1.0 + scale) + shift)
    net = (jnp.einsum('oc,ncthw->nothw', w_net.reshape(ch, ch), m)
           + b_net.reshape(1, -1, 1, 1, 1))
    return x + gate * net


if __name__ == "__main__":
    # Small deterministic config consistent with the module:
    # in_features=32, batch=2, T=4, H=W=8  (flattened spatial = 256 = 2*128).
    N, C = 2, 32
    T, H, W = 4, 8, 8

    key = jax.random.PRNGKey(0)
    kx, kc, kwa, kba, kwn = jax.random.split(key, 5)

    x = jax.random.normal(kx, (N, C, T, H, W), dtype=jnp.float32)
    c = jax.random.normal(kc, (N, C, T, H, W), dtype=jnp.float32)

    # --- Check 1: the module's actual initialization (adaLN zero-init) -------
    # gate == 0  =>  forward(x, c) == x exactly.
    w_ada0 = jnp.zeros((3 * C, C, 1, 1, 1), jnp.float32)
    b_ada0 = jnp.zeros((3 * C,), jnp.float32)
    w_net0 = 0.02 * jax.random.normal(kwn, (C, C, 1, 1, 1), dtype=jnp.float32)
    b_net0 = jnp.zeros((C,), jnp.float32)

    out0 = jax.block_until_ready(adaln_zero3d(x, c, w_ada0, b_ada0, w_net0, b_net0))
    np.testing.assert_allclose(np.asarray(out0), np.asarray(x), rtol=0, atol=1e-6)

    # --- Check 2: random (non-zero) weights to exercise the full math --------
    bound = 1.0 / np.sqrt(C)
    w_ada = jax.random.uniform(kwa, (3 * C, C, 1, 1, 1),
                               minval=-bound, maxval=bound, dtype=jnp.float32)
    b_ada = jax.random.uniform(kba, (3 * C,),
                               minval=-bound, maxval=bound, dtype=jnp.float32)
    w_net = w_net0
    b_net = jnp.zeros((C,), jnp.float32)

    out = jax.block_until_ready(adaln_zero3d(x, c, w_ada, b_ada, w_net, b_net))
    ref = jax.block_until_ready(_reference(x, c, w_ada, b_ada, w_net, b_net))

    assert out.shape == ref.shape, (out.shape, ref.shape)
    # Loose-ish tolerance: Mosaic and XLA may use different default MXU pass
    # counts for f32 matmuls; real bugs produce O(0.1-1) errors, far above this.
    np.testing.assert_allclose(np.asarray(out), np.asarray(ref),
                               rtol=1e-2, atol=1e-2)
    print("KERNEL_OK")
</pallas_src>

<mosaic_0001>
module attributes {stable_mosaic.version = 11 : i64} {
  func.func @_adaln_zero3d_kernel(%arg0: i32, %arg1: i32, %arg2: memref<1x32x256xf32, #tpu.memory_space<vmem>>, %arg3: memref<1x32x256xf32, #tpu.memory_space<vmem>>, %arg4: memref<32x32xf32, #tpu.memory_space<vmem>>, %arg5: memref<32x32xf32, #tpu.memory_space<vmem>>, %arg6: memref<32x32xf32, #tpu.memory_space<vmem>>, %arg7: memref<32x32xf32, #tpu.memory_space<vmem>>, %arg8: memref<32x1xf32, #tpu.memory_space<vmem>>, %arg9: memref<32x1xf32, #tpu.memory_space<vmem>>, %arg10: memref<32x1xf32, #tpu.memory_space<vmem>>, %arg11: memref<32x1xf32, #tpu.memory_space<vmem>>, %arg12: memref<1x32x256xf32, #tpu.memory_space<vmem>>) attributes {dimension_semantics = [#tpu.dimension_semantics<parallel>, #tpu.dimension_semantics<parallel>], iteration_bounds = array<i64: 2, 1>, scalar_prefetch = 0 : i64, scratch_operands = 0 : i64, tpu.core_type = #tpu.core_type<tc>, window_params = [{transform_indices = @transform_0, window_bounds = array<i64: 1, 32, 256>}, {transform_indices = @transform_1, window_bounds = array<i64: 1, 32, 256>}, {pipeline_mode = #tpu.pipeline_mode<synchronous>, transform_indices = @transform_2, window_bounds = array<i64: 32, 32>}, {pipeline_mode = #tpu.pipeline_mode<synchronous>, transform_indices = @transform_3, window_bounds = array<i64: 32, 32>}, {pipeline_mode = #tpu.pipeline_mode<synchronous>, transform_indices = @transform_4, window_bounds = array<i64: 32, 32>}, {pipeline_mode = #tpu.pipeline_mode<synchronous>, transform_indices = @transform_5, window_bounds = array<i64: 32, 32>}, {pipeline_mode = #tpu.pipeline_mode<synchronous>, transform_indices = @transform_6, window_bounds = array<i64: 32, 1>}, {pipeline_mode = #tpu.pipeline_mode<synchronous>, transform_indices = @transform_7, window_bounds = array<i64: 32, 1>}, {pipeline_mode = #tpu.pipeline_mode<synchronous>, transform_indices = @transform_8, window_bounds = array<i64: 32, 1>}, {pipeline_mode = #tpu.pipeline_mode<synchronous>, transform_indices = @transform_9, window_bounds = array<i64: 32, 1>}, {transform_indices = @transform_10, window_bounds = array<i64: 1, 32, 256>}]} {
    %c0 = arith.constant 0 : index
    %c0_0 = arith.constant 0 : index
    %c0_1 = arith.constant 0 : index
    %0 = vector.load %arg2[%c0, %c0_0, %c0_1] : memref<1x32x256xf32, #tpu.memory_space<vmem>>, vector<1x32x256xf32>
    %1 = vector.shape_cast %0 : vector<1x32x256xf32> to vector<32x256xf32>
    %c0_2 = arith.constant 0 : index
    %c0_3 = arith.constant 0 : index
    %c0_4 = arith.constant 0 : index
    %2 = vector.load %arg3[%c0_2, %c0_3, %c0_4] : memref<1x32x256xf32, #tpu.memory_space<vmem>>, vector<1x32x256xf32>
    %3 = vector.shape_cast %2 : vector<1x32x256xf32> to vector<32x256xf32>
    %4 = arith.negf %3 : vector<32x256xf32>
    %5 = math.exp %4 : vector<32x256xf32>
    %cst = arith.constant 1.000000e+00 : f32
    %6 = vector.broadcast %cst : f32 to vector<32x256xf32>
    %7 = arith.addf %6, %5 : vector<32x256xf32>
    %8 = arith.divf %6, %7 : vector<32x256xf32>
    %9 = arith.mulf %3, %8 : vector<32x256xf32>
    %c0_5 = arith.constant 0 : index
    %c0_6 = arith.constant 0 : index
    %10 = vector.load %arg4[%c0_5, %c0_6] : memref<32x32xf32, #tpu.memory_space<vmem>>, vector<32x32xf32>
    %cst_7 = arith.constant dense<0.000000e+00> : vector<32x256xf32>
    %11 = tpu.matmul %10, %9, %cst_7 {dimension_numbers = #tpu.dot_dimension_numbers<[1], [0], [0], [1], [0, 0, 1, 1], [], []>} : vector<32x32xf32>, vector<32x256xf32>, vector<32x256xf32> -> vector<32x256xf32>
    %c0_8 = arith.constant 0 : index
    %c0_9 = arith.constant 0 : index
    %12 = vector.load %arg8[%c0_8, %c0_9] : memref<32x1xf32, #tpu.memory_space<vmem>>, vector<32x1xf32>
    %13 = vector.broadcast %12 : vector<32x1xf32> to vector<32x256xf32>
    %14 = arith.addf %11, %13 : vector<32x256xf32>
    %c0_10 = arith.constant 0 : index
    %c0_11 = arith.constant 0 : index
    %15 = vector.load %arg5[%c0_10, %c0_11] : memref<32x32xf32, #tpu.memory_space<vmem>>, vector<32x32xf32>
    %cst_12 = arith.constant dense<0.000000e+00> : vector<32x256xf32>
    %16 = tpu.matmul %15, %9, %cst_12 {dimension_numbers = #tpu.dot_dimension_numbers<[1], [0], [0], [1], [0, 0, 1, 1], [], []>} : vector<32x32xf32>, vector<32x256xf32>, vector<32x256xf32> -> vector<32x256xf32>
    %c0_13 = arith.constant 0 : index
    %c0_14 = arith.constant 0 : index
    %17 = vector.load %arg9[%c0_13, %c0_14] : memref<32x1xf32, #tpu.memory_space<vmem>>, vector<32x1xf32>
    %18 = vector.broadcast %17 : vector<32x1xf32> to vector<32x256xf32>
    %19 = arith.addf %16, %18 : vector<32x256xf32>
    %c0_15 = arith.constant 0 : index
    %c0_16 = arith.constant 0 : index
    %20 = vector.load %arg6[%c0_15, %c0_16] : memref<32x32xf32, #tpu.memory_space<vmem>>, vector<32x32xf32>
    %cst_17 = arith.constant dense<0.000000e+00> : vector<32x256xf32>
    %21 = tpu.matmul %20, %9, %cst_17 {dimension_numbers = #tpu.dot_dimension_numbers<[1], [0], [0], [1], [0, 0, 1, 1], [], []>} : vector<32x32xf32>, vector<32x256xf32>, vector<32x256xf32> -> vector<32x256xf32>
    %c0_18 = arith.constant 0 : index
    %c0_19 = arith.constant 0 : index
    %22 = vector.load %arg10[%c0_18, %c0_19] : memref<32x1xf32, #tpu.memory_space<vmem>>, vector<32x1xf32>
    %23 = vector.broadcast %22 : vector<32x1xf32> to vector<32x256xf32>
    %24 = arith.addf %21, %23 : vector<32x256xf32>
    %cst_20 = arith.constant 1.000000e+00 : f32
    %25 = vector.broadcast %cst_20 : f32 to vector<32x256xf32>
    %26 = arith.addf %25, %19 : vector<32x256xf32>
    %27 = arith.mulf %1, %26 : vector<32x256xf32>
    %28 = arith.addf %27, %14 : vector<32x256xf32>
    %29 = arith.negf %28 : vector<32x256xf32>
    %30 = math.exp %29 : vector<32x256xf32>
    %cst_21 = arith.constant 1.000000e+00 : f32
    %31 = vector.broadcast %cst_21 : f32 to vector<32x256xf32>
    %32 = arith.addf %31, %30 : vector<32x256xf32>
    %33 = arith.divf %31, %32 : vector<32x256xf32>
    %34 = arith.mulf %28, %33 : vector<32x256xf32>
    %c0_22 = arith.constant 0 : index
    %c0_23 = arith.constant 0 : index
    %35 = vector.load %arg7[%c0_22, %c0_23] : memref<32x32xf32, #tpu.memory_space<vmem>>, vector<32x32xf32>
    %cst_24 = arith.constant dense<0.000000e+00> : vector<32x256xf32>
    %36 = tpu.matmul %35, %34, %cst_24 {dimension_numbers = #tpu.dot_dimension_numbers<[1], [0], [0], [1], [0, 0, 1, 1], [], []>} : vector<32x32xf32>, vector<32x256xf32>, vector<32x256xf32> -> vector<32x256xf32>
    %c0_25 = arith.constant 0 : index
    %c0_26 = arith.constant 0 : index
    %37 = vector.load %arg11[%c0_25, %c0_26] : memref<32x1xf32, #tpu.memory_space<vmem>>, vector<32x1xf32>
    %38 = vector.broadcast %37 : vector<32x1xf32> to vector<32x256xf32>
    %39 = arith.addf %36, %38 : vector<32x256xf32>
    %40 = arith.mulf %24, %39 : vector<32x256xf32>
    %41 = arith.addf %1, %40 : vector<32x256xf32>
    %c0_27 = arith.constant 0 : index
    %c0_28 = arith.constant 0 : index
    %c0_29 = arith.constant 0 : index
    %42 = vector.load %arg12[%c0_27, %c0_28, %c0_29] : memref<1x32x256xf32, #tpu.memory_space<vmem>>, vector<1x32x256xf32>
    %43 = vector.shape_cast %42 : vector<1x32x256xf32> to vector<32x256xf32>
    %44 = vector.shape_cast %41 : vector<32x256xf32> to vector<1x32x256xf32>
    tpu.vector_store %arg12[%c0_27, %c0_28, %c0_29], %44 {strides = array<i32>} : memref<1x32x256xf32, #tpu.memory_space<vmem>>, vector<1x32x256xf32>,
    return
  }
  func.func @transform_0(%arg0: i32, %arg1: i32) -> (i32, i32, i32) {
    %c0_i32 = arith.constant 0 : i32
    %c0_i32_0 = arith.constant 0 : i32
    return %arg0, %c0_i32, %arg1 : i32, i32, i32
  }
  func.func @transform_1(%arg0: i32, %arg1: i32) -> (i32, i32, i32) {
    %c0_i32 = arith.constant 0 : i32
    %c0_i32_0 = arith.constant 0 : i32
    return %arg0, %c0_i32, %arg1 : i32, i32, i32
  }
  func.func @transform_2(%arg0: i32, %arg1: i32) -> (i32, i32) {
    %c0_i32 = arith.constant 0 : i32
    %c0_i32_0 = arith.constant 0 : i32
    %c0_i32_1 = arith.constant 0 : i32
    return %c0_i32, %c0_i32_0 : i32, i32
  }
  func.func @transform_3(%arg0: i32, %arg1: i32) -> (i32, i32) {
    %c0_i32 = arith.constant 0 : i32
    %c0_i32_0 = arith.constant 0 : i32
    %c0_i32_1 = arith.constant 0 : i32
    return %c0_i32, %c0_i32_0 : i32, i32
  }
  func.func @transform_4(%arg0: i32, %arg1: i32) -> (i32, i32) {
    %c0_i32 = arith.constant 0 : i32
    %c0_i32_0 = arith.constant 0 : i32
    %c0_i32_1 = arith.constant 0 : i32
    return %c0_i32, %c0_i32_0 : i32, i32
  }
  func.func @transform_5(%arg0: i32, %arg1: i32) -> (i32, i32) {
    %c0_i32 = arith.constant 0 : i32
    %c0_i32_0 = arith.constant 0 : i32
    %c0_i32_1 = arith.constant 0 : i32
    return %c0_i32, %c0_i32_0 : i32, i32
  }
  func.func @transform_6(%arg0: i32, %arg1: i32) -> (i32, i32) {
    %c0_i32 = arith.constant 0 : i32
    %c0_i32_0 = arith.constant 0 : i32
    %c0_i32_1 = arith.constant 0 : i32
    return %c0_i32, %c0_i32_0 : i32, i32
  }
  func.func @transform_7(%arg0: i32, %arg1: i32) -> (i32, i32) {
    %c0_i32 = arith.constant 0 : i32
    %c0_i32_0 = arith.constant 0 : i32
    %c0_i32_1 = arith.constant 0 : i32
    return %c0_i32, %c0_i32_0 : i32, i32
  }
  func.func @transform_8(%arg0: i32, %arg1: i32) -> (i32, i32) {
    %c0_i32 = arith.constant 0 : i32
    %c0_i32_0 = arith.constant 0 : i32
    %c0_i32_1 = arith.constant 0 : i32
    return %c0_i32, %c0_i32_0 : i32, i32
  }
  func.func @transform_9(%arg0: i32, %arg1: i32) -> (i32, i32) {
    %c0_i32 = arith.constant 0 : i32
    %c0_i32_0 = arith.constant 0 : i32
    %c0_i32_1 = arith.constant 0 : i32
    return %c0_i32, %c0_i32_0 : i32, i32
  }
  func.func @transform_10(%arg0: i32, %arg1: i32) -> (i32, i32, i32) {
    %c0_i32 = arith.constant 0 : i32
    %c0_i32_0 = arith.constant 0 : i32
    return %arg0, %c0_i32, %arg1 : i32, i32, i32
  }
}

</mosaic_0001>

<llo_original>
// kernel: tpu_custom_call.1
$region0: #{tpu_custom_call.1}
  #allocation0 [shape = 'u32[]', space=smem, size = 0x4, offset = 0x4, fixed_abs, tag = 'smem constant byte address 0x4 - core index']
  #allocation1 [shape = 'u32[72,128]{1,0:T(1,128)}', space=vmem, size = 0x9000, scoped, tag = 'internal scratch']
  %s0 = inlined_call_operand.hbm [shape: f32[2,32,256], index: 0, kind: input, shape index: {}]
  %s1 = inlined_call_operand.hbm [shape: f32[2,32,256], index: 1, kind: input, shape index: {}]
  %s2 = inlined_call_operand.vmem [shape: f32[32,32], index: 2, kind: input, shape index: {}]
  %s3 = inlined_call_operand.vmem [shape: f32[32,32], index: 3, kind: input, shape index: {}]
  %s4 = inlined_call_operand.vmem [shape: f32[32,32], index: 4, kind: input, shape index: {}]
  %s5 = inlined_call_operand.vmem [shape: f32[32,32], index: 5, kind: input, shape index: {}]
  %s6 = inlined_call_operand.vmem [shape: f32[32,1], index: 6, kind: input, shape index: {}]
  %s7 = inlined_call_operand.vmem [shape: f32[32,1], index: 7, kind: input, shape index: {}]
  %s8 = inlined_call_operand.vmem [shape: f32[32,1], index: 8, kind: input, shape index: {}]
  %s9 = inlined_call_operand.vmem [shape: f32[32,1], index: 9, kind: input, shape index: {}]
  %s10 = inlined_call_operand.hbm [shape: f32[2,32,256], index: 10, kind: output, shape index: {}]
  %s11 = sld [smem:[#allocation0]]
  $region81: #{tpu_custom_call.1} parent=0
    _
  %s13 = ssub.s32 1, %s11
  %s14 = scalar_select 0, %s13, %s11
  $region1: #{tpu_custom_call.1} parent=0
    #allocation2 [shape = 'u8[65536]{0}', space=vmem, size = 0x10000, scoped, tag = 'input window, operand 0']
    #allocation3 [shape = 's32[2]{0}', space=sflag, size = 0x8, scoped, tag = 'scoped memory for tpu_custom_call.1']
    #allocation4 [shape = 's32[2]{0}', space=sflag, size = 0x8, scoped, tag = 'scoped memory for tpu_custom_call.1']
    #allocation5 [shape = 'u8[65536]{0}', space=vmem, size = 0x10000, scoped, tag = 'input window, operand 1']
    #allocation6 [shape = 's32[2]{0}', space=sflag, size = 0x8, scoped, tag = 'scoped memory for tpu_custom_call.1']
    #allocation7 [shape = 'u8[65536]{0}', space=vmem, size = 0x10000, scoped, tag = 'output window, operand 0']
    %15 = vsyncpa [#allocation3], 0
    %s16 = scalar_lea.sflag [#allocation3], 1
    %17 = vsyncpa %s16, 0
    %18 = vsyncpa [#allocation6], 0
    %s19 = scalar_lea.sflag [#allocation6], 1
    %20 = vsyncpa %s19, 0
    %21 = vsyncpa [#allocation4], 0
    %s22 = scalar_lea.sflag [#allocation4], 1
    %23 = vsyncpa %s22, 0
    loop: start=0, step=1, limit=4
    $region2: #{tpu_custom_call.1} parent=1 // loop_pre_header
      _
    $region3: #{tpu_custom_call.1} parent=1 // loop_header
      %s25 = sphi 0, %s29
      %p26 = scmp.ge.s32.totalorder %s25, 4
      %s32 = sphi 0, %s44
      %s33 = sphi 0, %s40
      %s34 = sphi 0, %s32
      %s35 = sphi 0, %s33
      %s36 = sphi 0, %s34
      %s37 = sphi 0, %s35
      %s49 = sphi 0, %s51
      %s52 = sphi 0, %s49
      %s53 = sphi 0, %s52
      %s69 = sphi 0, %s53
      %s77 = sphi 0, %s79
      %s80 = sphi 0, %s77
      %s81 = sphi 0, %s80
      %s97 = sphi 0, %s81
      %s101 = sphi 0, %s101
      %s103 = sphi 0, %s101
      %s104 = sphi 0, %s103
      %s118 = sphi 0, %s104
      %s122 = sphi 0, %s122
      %s124 = sphi 0, %s122
      %s125 = sphi 0, %s124
      %s139 = sphi 0, %s125
      %s143 = sphi 0, %s143
      %s145 = sphi 0, %s143
      %s146 = sphi 0, %s145
      %s160 = sphi 0, %s146
      %s164 = sphi 0, %s164
      %s166 = sphi 0, %s164
      %s167 = sphi 0, %s166
      %s181 = sphi 0, %s167
      %s185 = sphi 0, %s185
      %s187 = sphi 0, %s185
      %s188 = sphi 0, %s187
      %s202 = sphi 0, %s188
      %s206 = sphi 0, %s206
      %s208 = sphi 0, %s206
      %s209 = sphi 0, %s208
      %s223 = sphi 0, %s209
      %s227 = sphi 0, %s227
      %s229 = sphi 0, %s227
      %s230 = sphi 0, %s229
      %s244 = sphi 0, %s230
      %s248 = sphi 0, %s248
      %s250 = sphi 0, %s248
      %s251 = sphi 0, %s250
      %s265 = sphi 0, %s251
      %s273 = sphi 0, %s275
      %s276 = sphi 0, %s273
      %s277 = sphi 0, %s276
      %s293 = sphi 0, %s277
    $region4: #{tpu_custom_call.1} parent=1 // loop_header_branch
      %28 = sbr.rel (%p26) target = $region8
    $region5: #{tpu_custom_call.1} parent=1 // loop_body
      %s30 = ssub.s32 %s25, 1
      %s31 = ssub.s32 %s25, 2
      %s38 = sadd.s32 1, %s33
      %p39 = scmp.ge.s32.totalorder %s38, 1
      %s40 = scalar_select %p39, 0, %s38
      %s41 = sadd.s32 1, %s32
      %s42 = scalar_select %p39, %s41, %s32
      %p43 = scmp.ge.s32.totalorder %s42, 2
      %s44 = scalar_select %p43, 0, %s42
      %s45 = ssub.s32 %s32, %s44
      %s46 = ssub.s32 %s33, %s40
      %s47 = sor.u32 %s45, %s46
      %p48 = scmp.eq.s32.totalorder %s47, 0
      %s50 = sadd.s32 %s49, 1
      %s51 = scalar_select %p48, %s49, %s50
      %p54 = pneg %p48
      %p55 = scmp.eq.s32.totalorder %s25, 1
      %p56 = por %p54, %p55
      %p57 = scmp.ne.s32.totalorder %s49, %s52
      %p58 = scmp.eq.s32.totalorder %s25, 0
      %p59 = por %p57, %p58
      %p60 = scmp.ne.s32.totalorder %s49, %s52
      %p61 = scmp.eq.s32.totalorder %s30, 1
      %p62 = por %p60, %p61
      %p63 = scmp.ne.s32.totalorder %s52, %s53
      %p64 = scmp.eq.s32.totalorder %s30, 0
      %p65 = por %p63, %p64
      %p66 = scmp.ne.s32.totalorder %s52, %s53
      %p67 = scmp.eq.s32.totalorder %s31, 1
      %p68 = por %p66, %p67
      %p70 = scmp.ne.s32.totalorder %s53, %s69
      %p71 = scmp.eq.s32.totalorder %s31, 0
      %p72 = por %p70, %p71
      %s73 = ssub.s32 %s32, %s44
      %s74 = ssub.s32 %s33, %s40
      %s75 = sor.u32 %s73, %s74
      %p76 = scmp.eq.s32.totalorder %s75, 0
      %s78 = sadd.s32 %s77, 1
      %s79 = scalar_select %p76, %s77, %s78
      %p82 = pneg %p76
      %p83 = scmp.eq.s32.totalorder %s25, 1
      %p84 = por %p82, %p83
      %p85 = scmp.ne.s32.totalorder %s77, %s80
      %p86 = scmp.eq.s32.totalorder %s25, 0
      %p87 = por %p85, %p86
      %p88 = scmp.ne.s32.totalorder %s77, %s80
      %p89 = scmp.eq.s32.totalorder %s30, 1
      %p90 = por %p88, %p89
      %p91 = scmp.ne.s32.totalorder %s80, %s81
      %p92 = scmp.eq.s32.totalorder %s30, 0
      %p93 = por %p91, %p92
      %p94 = scmp.ne.s32.totalorder %s80, %s81
      %p95 = scmp.eq.s32.totalorder %s31, 1
      %p96 = por %p94, %p95
      %p98 = scmp.ne.s32.totalorder %s81, %s97
      %p99 = scmp.eq.s32.totalorder %s31, 0
      %p100 = por %p98, %p99
      %s102 = sadd.s32 %s101, 1
      %p105 = scmp.eq.s32.totalorder %s25, 1
      %p106 = scmp.ne.s32.totalorder %s101, %s103
      %p107 = scmp.eq.s32.totalorder %s25, 0
      %p108 = por %p106, %p107
      %p109 = scmp.ne.s32.totalorder %s101, %s103
      %p110 = scmp.eq.s32.totalorder %s30, 1
      %p111 = por %p109, %p110
      %p112 = scmp.ne.s32.totalorder %s103, %s104
      %p113 = scmp.eq.s32.totalorder %s30, 0
      %p114 = por %p112, %p113
      %p115 = scmp.ne.s32.totalorder %s103, %s104
      %p116 = scmp.eq.s32.totalorder %s31, 1
      %p117 = por %p115, %p116
      %p119 = scmp.ne.s32.totalorder %s104, %s118
      %p120 = scmp.eq.s32.totalorder %s31, 0
      %p121 = por %p119, %p120
      %s123 = sadd.s32 %s122, 1
      %p126 = scmp.eq.s32.totalorder %s25, 1
      %p127 = scmp.ne.s32.totalorder %s122, %s124
      %p128 = scmp.eq.s32.totalorder %s25, 0
      %p129 = por %p127, %p128
      %p130 = scmp.ne.s32.totalorder %s122, %s124
      %p131 = scmp.eq.s32.totalorder %s30, 1
      %p132 = por %p130, %p131
      %p133 = scmp.ne.s32.totalorder %s124, %s125
      %p134 = scmp.eq.s32.totalorder %s30, 0
      %p135 = por %p133, %p134
      %p136 = scmp.ne.s32.totalorder %s124, %s125
      %p137 = scmp.eq.s32.totalorder %s31, 1
      %p138 = por %p136, %p137
      %p140 = scmp.ne.s32.totalorder %s125, %s139
      %p141 = scmp.eq.s32.totalorder %s31, 0
      %p142 = por %p140, %p141
      %s144 = sadd.s32 %s143, 1
      %p147 = scmp.eq.s32.totalorder %s25, 1
      %p148 = scmp.ne.s32.totalorder %s143, %s145
      %p149 = scmp.eq.s32.totalorder %s25, 0
      %p150 = por %p148, %p149
      %p151 = scmp.ne.s32.totalorder %s143, %s145
      %p152 = scmp.eq.s32.totalorder %s30, 1
      %p153 = por %p151, %p152
      %p154 = scmp.ne.s32.totalorder %s145, %s146
      %p155 = scmp.eq.s32.totalorder %s30, 0
      %p156 = por %p154, %p155
      %p157 = scmp.ne.s32.totalorder %s145, %s146
      %p158 = scmp.eq.s32.totalorder %s31, 1
      %p159 = por %p157, %p158
      %p161 = scmp.ne.s32.totalorder %s146, %s160
      %p162 = scmp.eq.s32.totalorder %s31, 0
      %p163 = por %p161, %p162
      %s165 = sadd.s32 %s164, 1
      %p168 = scmp.eq.s32.totalorder %s25, 1
      %p169 = scmp.ne.s32.totalorder %s164, %s166
      %p170 = scmp.eq.s32.totalorder %s25, 0
      %p171 = por %p169, %p170
      %p172 = scmp.ne.s32.totalorder %s164, %s166
      %p173 = scmp.eq.s32.totalorder %s30, 1
      %p174 = por %p172, %p173
      %p175 = scmp.ne.s32.totalorder %s166, %s167
      %p176 = scmp.eq.s32.totalorder %s30, 0
      %p177 = por %p175, %p176
      %p178 = scmp.ne.s32.totalorder %s166, %s167
      %p179 = scmp.eq.s32.totalorder %s31, 1
      %p180 = por %p178, %p179
      %p182 = scmp.ne.s32.totalorder %s167, %s181
      %p183 = scmp.eq.s32.totalorder %s31, 0
      %p184 = por %p182, %p183
      %s186 = sadd.s32 %s185, 1
      %p189 = scmp.eq.s32.totalorder %s25, 1
      %p190 = scmp.ne.s32.totalorder %s185, %s187
      %p191 = scmp.eq.s32.totalorder %s25, 0
      %p192 = por %p190, %p191
      %p193 = scmp.ne.s32.totalorder %s185, %s187
      %p194 = scmp.eq.s32.totalorder %s30, 1
      %p195 = por %p193, %p194
      %p196 = scmp.ne.s32.totalorder %s187, %s188
      %p197 = scmp.eq.s32.totalorder %s30, 0
      %p198 = por %p196, %p197
      %p199 = scmp.ne.s32.totalorder %s187, %s188
      %p200 = scmp.eq.s32.totalorder %s31, 1
      %p201 = por %p199, %p200
      %p203 = scmp.ne.s32.totalorder %s188, %s202
      %p204 = scmp.eq.s32.totalorder %s31, 0
      %p205 = por %p203, %p204
      %s207 = sadd.s32 %s206, 1
      %p210 = scmp.eq.s32.totalorder %s25, 1
      %p211 = scmp.ne.s32.totalorder %s206, %s208
      %p212 = scmp.eq.s32.totalorder %s25, 0
      %p213 = por %p211, %p212
      %p214 = scmp.ne.s32.totalorder %s206, %s208
      %p215 = scmp.eq.s32.totalorder %s30, 1
      %p216 = por %p214, %p215
      %p217 = scmp.ne.s32.totalorder %s208, %s209
      %p218 = scmp.eq.s32.totalorder %s30, 0
      %p219 = por %p217, %p218
      %p220 = scmp.ne.s32.totalorder %s208, %s209
      %p221 = scmp.eq.s32.totalorder %s31, 1
      %p222 = por %p220, %p221
      %p224 = scmp.ne.s32.totalorder %s209, %s223
      %p225 = scmp.eq.s32.totalorder %s31, 0
      %p226 = por %p224, %p225
      %s228 = sadd.s32 %s227, 1
      %p231 = scmp.eq.s32.totalorder %s25, 1
      %p232 = scmp.ne.s32.totalorder %s227, %s229
      %p233 = scmp.eq.s32.totalorder %s25, 0
      %p234 = por %p232, %p233
      %p235 = scmp.ne.s32.totalorder %s227, %s229
      %p236 = scmp.eq.s32.totalorder %s30, 1
      %p237 = por %p235, %p236
      %p238 = scmp.ne.s32.totalorder %s229, %s230
      %p239 = scmp.eq.s32.totalorder %s30, 0
      %p240 = por %p238, %p239
      %p241 = scmp.ne.s32.totalorder %s229, %s230
      %p242 = scmp.eq.s32.totalorder %s31, 1
      %p243 = por %p241, %p242
      %p245 = scmp.ne.s32.totalorder %s230, %s244
      %p246 = scmp.eq.s32.totalorder %s31, 0
      %p247 = por %p245, %p246
      %s249 = sadd.s32 %s248, 1
      %p252 = scmp.eq.s32.totalorder %s25, 1
      %p253 = scmp.ne.s32.totalorder %s248, %s250
      %p254 = scmp.eq.s32.totalorder %s25, 0
      %p255 = por %p253, %p254
      %p256 = scmp.ne.s32.totalorder %s248, %s250
      %p257 = scmp.eq.s32.totalorder %s30, 1
      %p258 = por %p256, %p257
      %p259 = scmp.ne.s32.totalorder %s250, %s251
      %p260 = scmp.eq.s32.totalorder %s30, 0
      %p261 = por %p259, %p260
      %p262 = scmp.ne.s32.totalorder %s250, %s251
      %p263 = scmp.eq.s32.totalorder %s31, 1
      %p264 = por %p262, %p263
      %p266 = scmp.ne.s32.totalorder %s251, %s265
      %p267 = scmp.eq.s32.totalorder %s31, 0
      %p268 = por %p266, %p267
      %s269 = ssub.s32 %s32, %s44
      %s270 = ssub.s32 %s33, %s40
      %s271 = sor.u32 %s269, %s270
      %p272 = scmp.eq.s32.totalorder %s271, 0
      %s274 = sadd.s32 %s273, 1
      %s275 = scalar_select %p272, %s273, %s274
      %p278 = pneg %p272
      %p279 = scmp.eq.s32.totalorder %s25, 1
      %p280 = por %p278, %p279
      %p281 = scmp.ne.s32.totalorder %s273, %s276
      %p282 = scmp.eq.s32.totalorder %s25, 0
      %p283 = por %p281, %p282
      %p284 = scmp.ne.s32.totalorder %s273, %s276
      %p285 = scmp.eq.s32.totalorder %s30, 1
      %p286 = por %p284, %p285
      %p287 = scmp.ne.s32.totalorder %s276, %s277
      %p288 = scmp.eq.s32.totalorder %s30, 0
      %p289 = por %p287, %p288
      %p290 = scmp.ne.s32.totalorder %s276, %s277
      %p291 = scmp.eq.s32.totalorder %s31, 1
      %p292 = por %p290, %p291
      %p294 = scmp.ne.s32.totalorder %s277, %s293
      %p295 = scmp.eq.s32.totalorder %s31, 0
      %p296 = por %p294, %p295
      %p297 = scmp.le.s32.totalorder 1, %s25
      %p298 = scmp.lt.s32.totalorder %s25, 3
      %p299 = pnand %p297, %p298
      %p300 = pneg %p299
      // Predicated region
      $region9: #{tpu_custom_call.1} parent=5 // pred_check
        _
      $region10: #{tpu_custom_call.1} parent=5 // pred_check_branch
        %302 = sbr.rel (%p299) target = $region12
      $region11: #{tpu_custom_call.1} parent=5 // pred_region
        %s303 = ssub.s32 %s25, 1
        // Predicated region
        $region13: #{tpu_custom_call.1} parent=11 // pred_check
          %p304 = pneg %p114
        $region14: #{tpu_custom_call.1} parent=11 // pred_check_branch
          %306 = sbr.rel (%p304) target = $region16
        $region15: #{tpu_custom_call.1} parent=11 // pred_region
          _
        $region16: #{tpu_custom_call.1} parent=11 // pred_fallthru
          _
        // Predicated region
        $region17: #{tpu_custom_call.1} parent=11 // pred_check
          %p307 = pneg %p135
        $region18: #{tpu_custom_call.1} parent=11 // pred_check_branch
          %309 = sbr.rel (%p307) target = $region20
        $region19: #{tpu_custom_call.1} parent=11 // pred_region
          _
        $region20: #{tpu_custom_call.1} parent=11 // pred_fallthru
          _
        // Predicated region
        $region21: #{tpu_custom_call.1} parent=11 // pred_check
          %p310 = pneg %p156
        $region22: #{tpu_custom_call.1} parent=11 // pred_check_branch
          %312 = sbr.rel (%p310) target = $region24
        $region23: #{tpu_custom_call.1} parent=11 // pred_region
          _
        $region24: #{tpu_custom_call.1} parent=11 // pred_fallthru
          _
        // Predicated region
        $region25: #{tpu_custom_call.1} parent=11 // pred_check
          %p313 = pneg %p177
        $region26: #{tpu_custom_call.1} parent=11 // pred_check_branch
          %315 = sbr.rel (%p313) target = $region28
        $region27: #{tpu_custom_call.1} parent=11 // pred_region
          _
        $region28: #{tpu_custom_call.1} parent=11 // pred_fallthru
          _
        // Predicated region
        $region29: #{tpu_custom_call.1} parent=11 // pred_check
          %p316 = pneg %p198
        $region30: #{tpu_custom_call.1} parent=11 // pred_check_branch
          %318 = sbr.rel (%p316) target = $region32
        $region31: #{tpu_custom_call.1} parent=11 // pred_region
          _
        $region32: #{tpu_custom_call.1} parent=11 // pred_fallthru
          _
        // Predicated region
        $region33: #{tpu_custom_call.1} parent=11 // pred_check
          %p319 = pneg %p219
        $region34: #{tpu_custom_call.1} parent=11 // pred_check_branch
          %321 = sbr.rel (%p319) target = $region36
        $region35: #{tpu_custom_call.1} parent=11 // pred_region
          _
        $region36: #{tpu_custom_call.1} parent=11 // pred_fallthru
          _
        // Predicated region
        $region37: #{tpu_custom_call.1} parent=11 // pred_check
          %p322 = pneg %p240
        $region38: #{tpu_custom_call.1} parent=11 // pred_check_branch
          %324 = sbr.rel (%p322) target = $region40
        $region39: #{tpu_custom_call.1} parent=11 // pred_region
          _
        $region40: #{tpu_custom_call.1} parent=11 // pred_fallthru
          _
        // Predicated region
        $region41: #{tpu_custom_call.1} parent=11 // pred_check
          %p325 = pneg %p261
        $region42: #{tpu_custom_call.1} parent=11 // pred_check_branch
          %327 = sbr.rel (%p325) target = $region44
        $region43: #{tpu_custom_call.1} parent=11 // pred_region
          _
        $region44: #{tpu_custom_call.1} parent=11 // pred_fallthru
          _
      $region12: #{tpu_custom_call.1} parent=5 // pred_fallthru
        _
      %p328 = scmp.lt.s32.totalorder %s25, 2
      // Predicated region
      $region45: #{tpu_custom_call.1} parent=5 // pred_check
        %p329 = pneg %p328
      $region46: #{tpu_custom_call.1} parent=5 // pred_check_branch
        %331 = sbr.rel (%p329) target = $region48
      $region47: #{tpu_custom_call.1} parent=5 // pred_region
        // Predicated region
        $region49: #{tpu_custom_call.1} parent=47 // pred_check
          %p332 = pneg %p59
        $region50: #{tpu_custom_call.1} parent=47 // pred_check_branch
          %334 = sbr.rel (%p332) target = $region52
        $region51: #{tpu_custom_call.1} parent=47 // pred_region
          %s335 = sand.u32 %s49, 1
          %s336 = scalar_lea.sflag [#allocation3], %s335
          %s337 = sand.u32 %s49, 1
          %s338 = smul.addr %s337, 64
          %s339 = scalar_lea.vmem [#allocation2], %s338
          %s340 = smul.u32 2, %s33
          %342 = vsyncadd %s336, 0
          %s343 = smul.addr %s32, 8
          %s344 = sadd.s32 %s340, %s343
          %s345 = smul.addr %s344, 8
          %s346 = scalar_lea.hbm %s0, %s345
          %s347 = sshll.u32 %s346, 4
          %s348 = int_to_ptr.hbm [resolvable:$true] %s347
          %s349 = sshll.u32 %s339, 4
          %s350 = int_to_ptr.vmem [resolvable:$true] %s349
          %355 = dma.hbm_to_vmem [thread:$0]  %s348, 1024, %s350, %s336, 256, 256, 16
        $region52: #{tpu_custom_call.1} parent=47 // pred_fallthru
          _
        // Predicated region
        $region53: #{tpu_custom_call.1} parent=47 // pred_check
          %p356 = pneg %p87
        $region54: #{tpu_custom_call.1} parent=47 // pred_check_branch
          %358 = sbr.rel (%p356) target = $region56
        $region55: #{tpu_custom_call.1} parent=47 // pred_region
          %s359 = sand.u32 %s77, 1
          %s360 = scalar_lea.sflag [#allocation6], %s359
          %s361 = sand.u32 %s77, 1
          %s362 = smul.addr %s361, 64
          %s363 = scalar_lea.vmem [#allocation5], %s362
          %s364 = smul.u32 2, %s33
          %366 = vsyncadd %s360, 0
          %s367 = smul.addr %s32, 8
          %s368 = sadd.s32 %s364, %s367
          %s369 = smul.addr %s368, 8
          %s370 = scalar_lea.hbm %s1, %s369
          %s371 = sshll.u32 %s370, 4
          %s372 = int_to_ptr.hbm [resolvable:$true] %s371
          %s373 = sshll.u32 %s363, 4
          %s374 = int_to_ptr.vmem [resolvable:$true] %s373
          %379 = dma.hbm_to_vmem [thread:$0]  %s372, 1024, %s374, %s360, 256, 256, 16
        $region56: #{tpu_custom_call.1} parent=47 // pred_fallthru
          _
      $region48: #{tpu_custom_call.1} parent=5 // pred_fallthru
        _
      %p380 = scmp.le.s32.totalorder 1, %s25
      %p381 = scmp.lt.s32.totalorder %s25, 3
      %p382 = pnand %p380, %p381
      %p383 = pneg %p382
      // Predicated region
      $region57: #{tpu_custom_call.1} parent=5 // pred_check
        _
      $region58: #{tpu_custom_call.1} parent=5 // pred_check_branch
        %385 = sbr.rel (%p382) target = $region60
      $region59: #{tpu_custom_call.1} parent=5 // pred_region
        %s386 = ssub.s32 %s25, 1
        %s387 = sand.u32 %s52, 1
        %s388 = scalar_lea.sflag [#allocation3], %s387
        %s389 = sand.u32 %s52, 1
        %s390 = smul.addr %s389, 64
        %s391 = scalar_lea.vmem [#allocation2], %s390
        // Predicated region
        $region61: #{tpu_custom_call.1} parent=59 // pred_check
          %p392 = pneg %p65
        $region62: #{tpu_custom_call.1} parent=59 // pred_check_branch
          %394 = sbr.rel (%p392) target = $region64
        $region63: #{tpu_custom_call.1} parent=59 // pred_region
          %396 = dma.done %s388, 1024
        $region64: #{tpu_custom_call.1} parent=59 // pred_fallthru
          _
        %s397 = sand.u32 %s80, 1
        %s398 = scalar_lea.sflag [#allocation6], %s397
        %s399 = sand.u32 %s80, 1
        %s400 = smul.addr %s399, 64
        %s401 = scalar_lea.vmem [#allocation5], %s400
        // Predicated region
        $region65: #{tpu_custom_call.1} parent=59 // pred_check
          %p402 = pneg %p93
        $region66: #{tpu_custom_call.1} parent=59 // pred_check_branch
          %404 = sbr.rel (%p402) target = $region68
        $region67: #{tpu_custom_call.1} parent=59 // pred_region
          %406 = dma.done %s398, 1024
        $region68: #{tpu_custom_call.1} parent=59 // pred_fallthru
          _
        %s407 = sand.u32 %s52, 1
        %s408 = scalar_lea.sflag [#allocation3], %s407
        %s409 = sand.u32 %s52, 1
        %s410 = smul.addr %s409, 64
        %s411 = scalar_lea.vmem [#allocation2], %s410
        %p412 = pneg %p65
        %p413 = pneg %p62
        %s414 = sand.u32 %s80, 1
        %s415 = scalar_lea.sflag [#allocation6], %s414
        %s416 = sand.u32 %s80, 1
        %s417 = smul.addr %s416, 64
        %s418 = scalar_lea.vmem [#allocation5], %s417
        %p419 = pneg %p93
        %p420 = pneg %p90
        %p421 = pneg %p114
        %p422 = pneg %p111
        %p423 = pneg %p135
        %p424 = pneg %p132
        %p425 = pneg %p156
        %p426 = pneg %p153
        %p427 = pneg %p177
        %p428 = pneg %p174
        %p429 = pneg %p198
        %p430 = pneg %p195
        %p431 = pneg %p219
        %p432 = pneg %p216
        %p433 = pneg %p240
        %p434 = pneg %p237
        %p435 = pneg %p261
        %p436 = pneg %p258
        %p437 = pneg %p289
        %p438 = pneg %p286
        %s439 = sand.u32 %s276, 1
        %s440 = scalar_lea.sflag [#allocation4], %s439
        %s441 = sand.u32 %s276, 1
        %s442 = smul.addr %s441, 64
        %s443 = scalar_lea.vmem [#allocation7], %s442
        %s444 = smul.u32 2, %s35
        %s445 = smul.u32 2, %s35
        %s446 = smul.u32 2, %s35
        %v447 = vld [vmem:[%s391] sm:$0xff]
        %v448 = vld [vmem:[%s391 + $0x8] sm:$0xff]
        %v449 = vld [vmem:[%s391 + $0x10] sm:$0xff]
        %v450 = vld [vmem:[%s391 + $0x18] sm:$0xff]
        %v451 = vld [vmem:[%s391 + $0x20] sm:$0xff]
        %v452 = vld [vmem:[%s391 + $0x28] sm:$0xff]
        %v453 = vld [vmem:[%s391 + $0x30] sm:$0xff]
        %v454 = vld [vmem:[%s391 + $0x38] sm:$0xff]
        %v455 = vld [vmem:[%s401] sm:$0xff]
        %v456 = vld [vmem:[%s401 + $0x8] sm:$0xff]
        %v457 = vld [vmem:[%s401 + $0x10] sm:$0xff]
        %v458 = vld [vmem:[%s401 + $0x18] sm:$0xff]
        %v459 = vld [vmem:[%s401 + $0x20] sm:$0xff]
        %v460 = vld [vmem:[%s401 + $0x28] sm:$0xff]
        %v461 = vld [vmem:[%s401 + $0x30] sm:$0xff]
        %v462 = vld [vmem:[%s401 + $0x38] sm:$0xff]
        %v463 = vxor.u32 %v455, 2147483648
        %v464 = vxor.u32 %v456, 2147483648
        %v465 = vxor.u32 %v457, 2147483648
        %v466 = vxor.u32 %v458, 2147483648
        %v467 = vxor.u32 %v459, 2147483648
        %v468 = vxor.u32 %v460, 2147483648
        %v469 = vxor.u32 %v461, 2147483648
        %v470 = vxor.u32 %v462, 2147483648
        %v471 = vmul.f32 %v463, 1.442695
        %v472 = vpow.pop %v471
        %v473 = vmul.f32 %v464, 1.442695
        %v474 = vpow.pop %v473
        %v475 = vmul.f32 %v465, 1.442695
        %v476 = vpow.pop %v475
        %v477 = vmul.f32 %v466, 1.442695
        %v478 = vpow.pop %v477
        %v479 = vmul.f32 %v467, 1.442695
        %v480 = vpow.pop %v479
        %v481 = vmul.f32 %v468, 1.442695
        %v482 = vpow.pop %v481
        %v483 = vmul.f32 %v469, 1.442695
        %v484 = vpow.pop %v483
        %v485 = vmul.f32 %v470, 1.442695
        %v486 = vpow.pop %v485
        %v487 = vadd.f32 %v472, 1.0
        %v488 = vadd.f32 %v474, 1.0
        %v489 = vadd.f32 %v476, 1.0
        %v490 = vadd.f32 %v478, 1.0
        %v491 = vadd.f32 %v480, 1.0
        %v492 = vadd.f32 %v482, 1.0
        %v493 = vadd.f32 %v484, 1.0
        %v494 = vadd.f32 %v486, 1.0
        %v495 = vrcp.pop %v487
        %v496 = vmul.f32 %v487, %v495
        %v497 = vsub.f32 1.0, %v496
        %v498 = vmul.f32 %v495, %v497
        %v499 = vadd.f32 %v495, %v498
        %vm500 = vweird.f32 %v487
        %vm501 = vweird.f32 %v495
        %vm502 = vmor %vm500, %vm501
        %v503 = vsel %vm502, %v495, %v499
        %v504 = vand.u32 2147483647, %v487
        %vm505 = vcmp.eq.f32.partialorder %v504, 8.507059e+37
        %v506 = vand.u32 %v487, 2147483648
        %v507 = vor.u32 1.1754944e-38, %v506
        %v508 = vsel %vm505, %v507, %v503
        %v509 = vmul.f32 1.0, %v508
        %v510 = vrcp.pop %v488
        %v511 = vmul.f32 %v488, %v510
        %v512 = vsub.f32 1.0, %v511
        %v513 = vmul.f32 %v510, %v512
        %v514 = vadd.f32 %v510, %v513
        %vm515 = vweird.f32 %v488
        %vm516 = vweird.f32 %v510
        %vm517 = vmor %vm515, %vm516
        %v518 = vsel %vm517, %v510, %v514
        %v519 = vand.u32 2147483647, %v488
        %vm520 = vcmp.eq.f32.partialorder %v519, 8.507059e+37
        %v521 = vand.u32 %v488, 2147483648
        %v522 = vor.u32 1.1754944e-38, %v521
        %v523 = vsel %vm520, %v522, %v518
        %v524 = vmul.f32 1.0, %v523
        %v525 = vrcp.pop %v489
        %v526 = vmul.f32 %v489, %v525
        %v527 = vsub.f32 1.0, %v526
        %v528 = vmul.f32 %v525, %v527
        %v529 = vadd.f32 %v525, %v528
        %vm530 = vweird.f32 %v489
        %vm531 = vweird.f32 %v525
        %vm532 = vmor %vm530, %vm531
        %v533 = vsel %vm532, %v525, %v529
        %v534 = vand.u32 2147483647, %v489
        %vm535 = vcmp.eq.f32.partialorder %v534, 8.507059e+37
        %v536 = vand.u32 %v489, 2147483648
        %v537 = vor.u32 1.1754944e-38, %v536
        %v538 = vsel %vm535, %v537, %v533
        %v539 = vmul.f32 1.0, %v538
        %v540 = vrcp.pop %v490
        %v541 = vmul.f32 %v490, %v540
        %v542 = vsub.f32 1.0, %v541
        %v543 = vmul.f32 %v540, %v542
        %v544 = vadd.f32 %v540, %v543
        %vm545 = vweird.f32 %v490
        %vm546 = vweird.f32 %v540
        %vm547 = vmor %vm545, %vm546
        %v548 = vsel %vm547, %v540, %v544
        %v549 = vand.u32 2147483647, %v490
        %vm550 = vcmp.eq.f32.partialorder %v549, 8.507059e+37
        %v551 = vand.u32 %v490, 2147483648
        %v552 = vor.u32 1.1754944e-38, %v551
        %v553 = vsel %vm550, %v552, %v548
        %v554 = vmul.f32 1.0, %v553
        %v555 = vrcp.pop %v491
        %v556 = vmul.f32 %v491, %v555
        %v557 = vsub.f32 1.0, %v556
        %v558 = vmul.f32 %v555, %v557
        %v559 = vadd.f32 %v555, %v558
        %vm560 = vweird.f32 %v491
        %vm561 = vweird.f32 %v555
        %vm562 = vmor %vm560, %vm561
        %v563 = vsel %vm562, %v555, %v559
        %v564 = vand.u32 2147483647, %v491
        %vm565 = vcmp.eq.f32.partialorder %v564, 8.507059e+37
        %v566 = vand.u32 %v491, 2147483648
        %v567 = vor.u32 1.1754944e-38, %v566
        %v568 = vsel %vm565, %v567, %v563
        %v569 = vmul.f32 1.0, %v568
        %v570 = vrcp.pop %v492
        %v571 = vmul.f32 %v492, %v570
        %v572 = vsub.f32 1.0, %v571
        %v573 = vmul.f32 %v570, %v572
        %v574 = vadd.f32 %v570, %v573
        %vm575 = vweird.f32 %v492
        %vm576 = vweird.f32 %v570
        %vm577 = vmor %vm575, %vm576
        %v578 = vsel %vm577, %v570, %v574
        %v579 = vand.u32 2147483647, %v492
        %vm580 = vcmp.eq.f32.partialorder %v579, 8.507059e+37
        %v581 = vand.u32 %v492, 2147483648
        %v582 = vor.u32 1.1754944e-38, %v581
        %v583 = vsel %vm580, %v582, %v578
        %v584 = vmul.f32 1.0, %v583
        %v585 = vrcp.pop %v493
        %v586 = vmul.f32 %v493, %v585
        %v587 = vsub.f32 1.0, %v586
        %v588 = vmul.f32 %v585, %v587
        %v589 = vadd.f32 %v585, %v588
        %vm590 = vweird.f32 %v493
        %vm591 = vweird.f32 %v585
        %vm592 = vmor %vm590, %vm591
        %v593 = vsel %vm592, %v585, %v589
        %v594 = vand.u32 2147483647, %v493
        %vm595 = vcmp.eq.f32.partialorder %v594, 8.507059e+37
        %v596 = vand.u32 %v493, 2147483648
        %v597 = vor.u32 1.1754944e-38, %v596
        %v598 = vsel %vm595, %v597, %v593
        %v599 = vmul.f32 1.0, %v598
        %v600 = vrcp.pop %v494
        %v601 = vmul.f32 %v494, %v600
        %v602 = vsub.f32 1.0, %v601
        %v603 = vmul.f32 %v600, %v602
        %v604 = vadd.f32 %v600, %v603
        %vm605 = vweird.f32 %v494
        %vm606 = vweird.f32 %v600
        %vm607 = vmor %vm605, %vm606
        %v608 = vsel %vm607, %v600, %v604
        %v609 = vand.u32 2147483647, %v494
        %vm610 = vcmp.eq.f32.partialorder %v609, 8.507059e+37
        %v611 = vand.u32 %v494, 2147483648
        %v612 = vor.u32 1.1754944e-38, %v611
        %v613 = vsel %vm610, %v612, %v608
        %v614 = vmul.f32 1.0, %v613
        %v615 = vmul.f32 %v455, %v509
        %v616 = vmul.f32 %v456, %v524
        %v617 = vmul.f32 %v457, %v539
        %v618 = vmul.f32 %v458, %v554
        %v619 = vmul.f32 %v459, %v569
        %v620 = vmul.f32 %v460, %v584
        %v621 = vmul.f32 %v461, %v599
        %v622 = vmul.f32 %v462, %v614
        %v623 = vld [vmem:[%s2] sm:$0xff]
        %v624 = vld [vmem:[%s2 + $0x8] sm:$0xff]
        %v625 = vld [vmem:[%s2 + $0x10] sm:$0xff]
        %v626 = vld [vmem:[%s2 + $0x18] sm:$0xff]
        %v627 = vld [vmem:[%s6] sm:$0xff]
        %v628 = vld [vmem:[%s6 + $0x8] sm:$0xff]
        %v629 = vld [vmem:[%s6 + $0x10] sm:$0xff]
        %v630 = vld [vmem:[%s6 + $0x18] sm:$0xff]
        %632 = vset.pattern.permute.xlu0 0
        %633 = vperm.xlu0 %632, %v627
        %v634 = vpop.permute.xlu0 %633
        %637 = vset.pattern.permute.xlu0 0
        %638 = vperm.xlu0 %637, %v628
        %v639 = vpop.permute.xlu0 %638
        %642 = vset.pattern.permute.xlu0 0
        %643 = vperm.xlu0 %642, %v629
        %v644 = vpop.permute.xlu0 %643
        %647 = vset.pattern.permute.xlu0 0
        %648 = vperm.xlu0 %647, %v630
        %v649 = vpop.permute.xlu0 %648
        %vm651 = vcmask 261120
        %v653 = vsel %vm651, %v623, 0
        %v656 = vsel %vm651, %v624, 0
        %v659 = vsel %vm651, %v625, 0
        %v662 = vsel %vm651, %v626, 0
        %664 = vmatpush.msra.mxu0 0.0
        %665 = vmatpush.msra.mxu0 0.0
        %666 = vmatpush.msra.mxu0 0.0
        %667 = vmatpush.msra.mxu0 0.0
        %668 = vmatpush.msra.mxu0 0.0
        %669 = vmatpush.msra.mxu0 0.0
        %670 = vmatpush.msra.mxu0 0.0
        %671 = vmatpush.msra.mxu0 0.0
        %672 = vmatpush.msra.mxu0 0.0
        %673 = vmatpush.msra.mxu0 0.0
        %674 = vmatpush.msra.mxu0 0.0
        %675 = vmatpush.msra.mxu0 0.0
        %676 = vmatpush.msra.mxu0 %v621
        %677 = vmatpush.msra.mxu0 %v619
        %678 = vmatpush.msra.mxu0 %v617
        %679 = vmatpush.msra.mxu0 %v615
        %680 = vmatmul.f32.gmra.mxu0 %v653
        %v681 = vpop.f32.mrf.mxu0
        %v682 = vadd.f32 %v634, %v681
        %683 = vmatmul.f32.gmra.mxu0 %v656
        %v684 = vpop.f32.mrf.mxu0
        %v685 = vadd.f32 %v639, %v684
        %686 = vmatmul.f32.gmra.mxu0 %v659
        %v687 = vpop.f32.mrf.mxu0
        %v688 = vadd.f32 %v644, %v687
        %689 = vmatmul.f32.gmra.mxu0 %v662
        %v690 = vpop.f32.mrf.mxu0
        %v691 = vadd.f32 %v649, %v690
        %692 = vdwg.mxu0
        %693 = vmatpush.msra.mxu0 0.0
        %694 = vmatpush.msra.mxu0 0.0
        %695 = vmatpush.msra.mxu0 0.0
        %696 = vmatpush.msra.mxu0 0.0
        %697 = vmatpush.msra.mxu0 0.0
        %698 = vmatpush.msra.mxu0 0.0
        %699 = vmatpush.msra.mxu0 0.0
        %700 = vmatpush.msra.mxu0 0.0
        %701 = vmatpush.msra.mxu0 0.0
        %702 = vmatpush.msra.mxu0 0.0
        %703 = vmatpush.msra.mxu0 0.0
        %704 = vmatpush.msra.mxu0 0.0
        %705 = vmatpush.msra.mxu0 %v622
        %706 = vmatpush.msra.mxu0 %v620
        %707 = vmatpush.msra.mxu0 %v618
        %708 = vmatpush.msra.mxu0 %v616
        %709 = vmatmul.f32.gmra.mxu0 %v653
        %v710 = vpop.f32.mrf.mxu0
        %v711 = vadd.f32 %v634, %v710
        %712 = vmatmul.f32.gmra.mxu0 %v656
        %v713 = vpop.f32.mrf.mxu0
        %v714 = vadd.f32 %v639, %v713
        %715 = vmatmul.f32.gmra.mxu0 %v659
        %v716 = vpop.f32.mrf.mxu0
        %v717 = vadd.f32 %v644, %v716
        %718 = vmatmul.f32.gmra.mxu0 %v662
        %v719 = vpop.f32.mrf.mxu0
        %v720 = vadd.f32 %v649, %v719
        %721 = vdwg.mxu0
        %v722 = vld [vmem:[%s3] sm:$0xff]
        %v723 = vld [vmem:[%s3 + $0x8] sm:$0xff]
        %v724 = vld [vmem:[%s3 + $0x10] sm:$0xff]
        %v725 = vld [vmem:[%s3 + $0x18] sm:$0xff]
        %v726 = vld [vmem:[%s7] sm:$0xff]
        %v727 = vld [vmem:[%s7 + $0x8] sm:$0xff]
        %v728 = vld [vmem:[%s7 + $0x10] sm:$0xff]
        %v729 = vld [vmem:[%s7 + $0x18] sm:$0xff]
        %731 = vset.pattern.permute.xlu0 0
        %732 = vperm.xlu0 %731, %v726
        %v733 = vpop.permute.xlu0 %732
        %736 = vset.pattern.permute.xlu0 0
        %737 = vperm.xlu0 %736, %v727
        %v738 = vpop.permute.xlu0 %737
        %741 = vset.pattern.permute.xlu0 0
        %742 = vperm.xlu0 %741, %v728
        %v743 = vpop.permute.xlu0 %742
        %746 = vset.pattern.permute.xlu0 0
        %747 = vperm.xlu0 %746, %v729
        %v748 = vpop.permute.xlu0 %747
        %v751 = vsel %vm651, %v722, 0
        %v754 = vsel %vm651, %v723, 0
        %v757 = vsel %vm651, %v724, 0
        %v760 = vsel %vm651, %v725, 0
        %762 = vmatpush.msra.mxu0 0.0
        %763 = vmatpush.msra.mxu0 0.0
        %764 = vmatpush.msra.mxu0 0.0
        %765 = vmatpush.msra.mxu0 0.0
        %766 = vmatpush.msra.mxu0 0.0
        %767 = vmatpush.msra.mxu0 0.0
        %768 = vmatpush.msra.mxu0 0.0
        %769 = vmatpush.msra.mxu0 0.0
        %770 = vmatpush.msra.mxu0 0.0
        %771 = vmatpush.msra.mxu0 0.0
        %772 = vmatpush.msra.mxu0 0.0
        %773 = vmatpush.msra.mxu0 0.0
        %774 = vmatpush.msra.mxu0 %v621
        %775 = vmatpush.msra.mxu0 %v619
        %776 = vmatpush.msra.mxu0 %v617
        %777 = vmatpush.msra.mxu0 %v615
        %778 = vmatmul.f32.gmra.mxu0 %v751
        %v779 = vpop.f32.mrf.mxu0
        %v780 = vadd.f32 %v733, %v779
        %781 = vmatmul.f32.gmra.mxu0 %v754
        %v782 = vpop.f32.mrf.mxu0
        %v783 = vadd.f32 %v738, %v782
        %784 = vmatmul.f32.gmra.mxu0 %v757
        %v785 = vpop.f32.mrf.mxu0
        %v786 = vadd.f32 %v743, %v785
        %787 = vmatmul.f32.gmra.mxu0 %v760
        %v788 = vpop.f32.mrf.mxu0
        %v789 = vadd.f32 %v748, %v788
        %790 = vdwg.mxu0
        %791 = vmatpush.msra.mxu0 0.0
        %792 = vmatpush.msra.mxu0 0.0
        %793 = vmatpush.msra.mxu0 0.0
        %794 = vmatpush.msra.mxu0 0.0
        %795 = vmatpush.msra.mxu0 0.0
        %796 = vmatpush.msra.mxu0 0.0
        %797 = vmatpush.msra.mxu0 0.0
        %798 = vmatpush.msra.mxu0 0.0
        %799 = vmatpush.msra.mxu0 0.0
        %800 = vmatpush.msra.mxu0 0.0
        %801 = vmatpush.msra.mxu0 0.0
        %802 = vmatpush.msra.mxu0 0.0
        %803 = vmatpush.msra.mxu0 %v622
        %804 = vmatpush.msra.mxu0 %v620
        %805 = vmatpush.msra.mxu0 %v618
        %806 = vmatpush.msra.mxu0 %v616
        %807 = vmatmul.f32.gmra.mxu0 %v751
        %v808 = vpop.f32.mrf.mxu0
        %v809 = vadd.f32 %v733, %v808
        %810 = vmatmul.f32.gmra.mxu0 %v754
        %v811 = vpop.f32.mrf.mxu0
        %v812 = vadd.f32 %v738, %v811
        %813 = vmatmul.f32.gmra.mxu0 %v757
        %v814 = vpop.f32.mrf.mxu0
        %v815 = vadd.f32 %v743, %v814
        %816 = vmatmul.f32.gmra.mxu0 %v760
        %v817 = vpop.f32.mrf.mxu0
        %v818 = vadd.f32 %v748, %v817
        %819 = vdwg.mxu0
        %v820 = vld [vmem:[%s4] sm:$0xff]
        %v821 = vld [vmem:[%s4 + $0x8] sm:$0xff]
        %v822 = vld [vmem:[%s4 + $0x10] sm:$0xff]
        %v823 = vld [vmem:[%s4 + $0x18] sm:$0xff]
        %v824 = vld [vmem:[%s8] sm:$0xff]
        %v825 = vld [vmem:[%s8 + $0x8] sm:$0xff]
        %v826 = vld [vmem:[%s8 + $0x10] sm:$0xff]
        %v827 = vld [vmem:[%s8 + $0x18] sm:$0xff]
        %829 = vset.pattern.permute.xlu0 0
        %830 = vperm.xlu0 %829, %v824
        %v831 = vpop.permute.xlu0 %830
        %834 = vset.pattern.permute.xlu0 0
        %835 = vperm.xlu0 %834, %v825
        %v836 = vpop.permute.xlu0 %835
        %839 = vset.pattern.permute.xlu0 0
        %840 = vperm.xlu0 %839, %v826
        %v841 = vpop.permute.xlu0 %840
        %844 = vset.pattern.permute.xlu0 0
        %845 = vperm.xlu0 %844, %v827
        %v846 = vpop.permute.xlu0 %845
        %v849 = vsel %vm651, %v820, 0
        %v852 = vsel %vm651, %v821, 0
        %v855 = vsel %vm651, %v822, 0
        %v858 = vsel %vm651, %v823, 0
        %860 = vmatpush.msra.mxu0 0.0
        %861 = vmatpush.msra.mxu0 0.0
        %862 = vmatpush.msra.mxu0 0.0
        %863 = vmatpush.msra.mxu0 0.0
        %864 = vmatpush.msra.mxu0 0.0
        %865 = vmatpush.msra.mxu0 0.0
        %866 = vmatpush.msra.mxu0 0.0
        %867 = vmatpush.msra.mxu0 0.0
        %868 = vmatpush.msra.mxu0 0.0
        %869 = vmatpush.msra.mxu0 0.0
        %870 = vmatpush.msra.mxu0 0.0
        %871 = vmatpush.msra.mxu0 0.0
        %872 = vmatpush.msra.mxu0 %v621
        %873 = vmatpush.msra.mxu0 %v619
        %874 = vmatpush.msra.mxu0 %v617
        %875 = vmatpush.msra.mxu0 %v615
        %876 = vmatmul.f32.gmra.mxu0 %v849
        %v877 = vpop.f32.mrf.mxu0
        %v878 = vadd.f32 %v831, %v877
        %879 = vmatmul.f32.gmra.mxu0 %v852
        %v880 = vpop.f32.mrf.mxu0
        %v881 = vadd.f32 %v836, %v880
        %882 = vmatmul.f32.gmra.mxu0 %v855
        %v883 = vpop.f32.mrf.mxu0
        %v884 = vadd.f32 %v841, %v883
        %885 = vmatmul.f32.gmra.mxu0 %v858
        %v886 = vpop.f32.mrf.mxu0
        %v887 = vadd.f32 %v846, %v886
        %888 = vdwg.mxu0
        %889 = vmatpush.msra.mxu0 0.0
        %890 = vmatpush.msra.mxu0 0.0
        %891 = vmatpush.msra.mxu0 0.0
        %892 = vmatpush.msra.mxu0 0.0
        %893 = vmatpush.msra.mxu0 0.0
        %894 = vmatpush.msra.mxu0 0.0
        %895 = vmatpush.msra.mxu0 0.0
        %896 = vmatpush.msra.mxu0 0.0
        %897 = vmatpush.msra.mxu0 0.0
        %898 = vmatpush.msra.mxu0 0.0
        %899 = vmatpush.msra.mxu0 0.0
        %900 = vmatpush.msra.mxu0 0.0
        %901 = vmatpush.msra.mxu0 %v622
        %902 = vmatpush.msra.mxu0 %v620
        %903 = vmatpush.msra.mxu0 %v618
        %904 = vmatpush.msra.mxu0 %v616
        %905 = vmatmul.f32.gmra.mxu0 %v849
        %v906 = vpop.f32.mrf.mxu0
        %v907 = vadd.f32 %v831, %v906
        %908 = vmatmul.f32.gmra.mxu0 %v852
        %v909 = vpop.f32.mrf.mxu0
        %v910 = vadd.f32 %v836, %v909
        %911 = vmatmul.f32.gmra.mxu0 %v855
        %v912 = vpop.f32.mrf.mxu0
        %v913 = vadd.f32 %v841, %v912
        %914 = vmatmul.f32.gmra.mxu0 %v858
        %v915 = vpop.f32.mrf.mxu0
        %v916 = vadd.f32 %v846, %v915
        %917 = vdwg.mxu0
        %v918 = vadd.f32 %v780, 1.0
        %v919 = vadd.f32 %v809, 1.0
        %v920 = vadd.f32 %v783, 1.0
        %v921 = vadd.f32 %v812, 1.0
        %v922 = vadd.f32 %v786, 1.0
        %v923 = vadd.f32 %v815, 1.0
        %v924 = vadd.f32 %v789, 1.0
        %v925 = vadd.f32 %v818, 1.0
        %v926 = vmul.f32 %v447, %v918
        %v927 = vmul.f32 %v448, %v919
        %v928 = vmul.f32 %v449, %v920
        %v929 = vmul.f32 %v450, %v921
        %v930 = vmul.f32 %v451, %v922
        %v931 = vmul.f32 %v452, %v923
        %v932 = vmul.f32 %v453, %v924
        %v933 = vmul.f32 %v454, %v925
        %v934 = vadd.f32 %v926, %v682
        %v935 = vadd.f32 %v927, %v711
        %v936 = vadd.f32 %v928, %v685
        %v937 = vadd.f32 %v929, %v714
        %v938 = vadd.f32 %v930, %v688
        %v939 = vadd.f32 %v931, %v717
        %v940 = vadd.f32 %v932, %v691
        %v941 = vadd.f32 %v933, %v720
        %v942 = vxor.u32 %v934, 2147483648
        %v943 = vxor.u32 %v935, 2147483648
        %v944 = vxor.u32 %v936, 2147483648
        %v945 = vxor.u32 %v937, 2147483648
        %v946 = vxor.u32 %v938, 2147483648
        %v947 = vxor.u32 %v939, 2147483648
        %v948 = vxor.u32 %v940, 2147483648
        %v949 = vxor.u32 %v941, 2147483648
        %v950 = vmul.f32 %v942, 1.442695
        %v951 = vpow.pop %v950
        %v952 = vmul.f32 %v943, 1.442695
        %v953 = vpow.pop %v952
        %v954 = vmul.f32 %v944, 1.442695
        %v955 = vpow.pop %v954
        %v956 = vmul.f32 %v945, 1.442695
        %v957 = vpow.pop %v956
        %v958 = vmul.f32 %v946, 1.442695
        %v959 = vpow.pop %v958
        %v960 = vmul.f32 %v947, 1.442695
        %v961 = vpow.pop %v960
        %v962 = vmul.f32 %v948, 1.442695
        %v963 = vpow.pop %v962
        %v964 = vmul.f32 %v949, 1.442695
        %v965 = vpow.pop %v964
        %v966 = vadd.f32 %v951, 1.0
        %v967 = vadd.f32 %v953, 1.0
        %v968 = vadd.f32 %v955, 1.0
        %v969 = vadd.f32 %v957, 1.0
        %v970 = vadd.f32 %v959, 1.0
        %v971 = vadd.f32 %v961, 1.0
        %v972 = vadd.f32 %v963, 1.0
        %v973 = vadd.f32 %v965, 1.0
        %v974 = vrcp.pop %v966
        %v975 = vmul.f32 %v966, %v974
        %v976 = vsub.f32 1.0, %v975
        %v977 = vmul.f32 %v974, %v976
        %v978 = vadd.f32 %v974, %v977
        %vm979 = vweird.f32 %v966
        %vm980 = vweird.f32 %v974
        %vm981 = vmor %vm979, %vm980
        %v982 = vsel %vm981, %v974, %v978
        %v983 = vand.u32 2147483647, %v966
        %vm984 = vcmp.eq.f32.partialorder %v983, 8.507059e+37
        %v985 = vand.u32 %v966, 2147483648
        %v986 = vor.u32 1.1754944e-38, %v985
        %v987 = vsel %vm984, %v986, %v982
        %v988 = vmul.f32 1.0, %v987
        %v989 = vrcp.pop %v967
        %v990 = vmul.f32 %v967, %v989
        %v991 = vsub.f32 1.0, %v990
        %v992 = vmul.f32 %v989, %v991
        %v993 = vadd.f32 %v989, %v992
        %vm994 = vweird.f32 %v967
        %vm995 = vweird.f32 %v989
        %vm996 = vmor %vm994, %vm995
        %v997 = vsel %vm996, %v989, %v993
        %v998 = vand.u32 2147483647, %v967
        %vm999 = vcmp.eq.f32.partialorder %v998, 8.507059e+37
        %v1000 = vand.u32 %v967, 2147483648
        %v1001 = vor.u32 1.1754944e-38, %v1000
        %v1002 = vsel %vm999, %v1001, %v997
        %v1003 = vmul.f32 1.0, %v1002
        %v1004 = vrcp.pop %v968
        %v1005 = vmul.f32 %v968, %v1004
        %v1006 = vsub.f32 1.0, %v1005
        %v1007 = vmul.f32 %v1004, %v1006
        %v1008 = vadd.f32 %v1004, %v1007
        %vm1009 = vweird.f32 %v968
        %vm1010 = vweird.f32 %v1004
        %vm1011 = vmor %vm1009, %vm1010
        %v1012 = vsel %vm1011, %v1004, %v1008
        %v1013 = vand.u32 2147483647, %v968
        %vm1014 = vcmp.eq.f32.partialorder %v1013, 8.507059e+37
        %v1015 = vand.u32 %v968, 2147483648
        %v1016 = vor.u32 1.1754944e-38, %v1015
        %v1017 = vsel %vm1014, %v1016, %v1012
        %v1018 = vmul.f32 1.0, %v1017
        %v1019 = vrcp.pop %v969
        %v1020 = vmul.f32 %v969, %v1019
        %v1021 = vsub.f32 1.0, %v1020
        %v1022 = vmul.f32 %v1019, %v1021
        %v1023 = vadd.f32 %v1019, %v1022
        %vm1024 = vweird.f32 %v969
        %vm1025 = vweird.f32 %v1019
        %vm1026 = vmor %vm1024, %vm1025
        %v1027 = vsel %vm1026, %v1019, %v1023
        %v1028 = vand.u32 2147483647, %v969
        %vm1029 = vcmp.eq.f32.partialorder %v1028, 8.507059e+37
        %v1030 = vand.u32 %v969, 2147483648
        %v1031 = vor.u32 1.1754944e-38, %v1030
        %v1032 = vsel %vm1029, %v1031, %v1027
        %v1033 = vmul.f32 1.0, %v1032
        %v1034 = vrcp.pop %v970
        %v1035 = vmul.f32 %v970, %v1034
        %v1036 = vsub.f32 1.0, %v1035
        %v1037 = vmul.f32 %v1034, %v1036
        %v1038 = vadd.f32 %v1034, %v1037
        %vm1039 = vweird.f32 %v970
        %vm1040 = vweird.f32 %v1034
        %vm1041 = vmor %vm1039, %vm1040
        %v1042 = vsel %vm1041, %v1034, %v1038
        %v1043 = vand.u32 2147483647, %v970
        %vm1044 = vcmp.eq.f32.partialorder %v1043, 8.507059e+37
        %v1045 = vand.u32 %v970, 2147483648
        %v1046 = vor.u32 1.1754944e-38, %v1045
        %v1047 = vsel %vm1044, %v1046, %v1042
        %v1048 = vmul.f32 1.0, %v1047
        %v1049 = vrcp.pop %v971
        %v1050 = vmul.f32 %v971, %v1049
        %v1051 = vsub.f32 1.0, %v1050
        %v1052 = vmul.f32 %v1049, %v1051
        %v1053 = vadd.f32 %v1049, %v1052
        %vm1054 = vweird.f32 %v971
        %vm1055 = vweird.f32 %v1049
        %vm1056 = vmor %vm1054, %vm1055
        %v1057 = vsel %vm1056, %v1049, %v1053
        %v1058 = vand.u32 2147483647, %v971
        %vm1059 = vcmp.eq.f32.partialorder %v1058, 8.507059e+37
        %v1060 = vand.u32 %v971, 2147483648
        %v1061 = vor.u32 1.1754944e-38, %v1060
        %v1062 = vsel %vm1059, %v1061, %v1057
        %v1063 = vmul.f32 1.0, %v1062
        %v1064 = vrcp.pop %v972
        %v1065 = vmul.f32 %v972, %v1064
        %v1066 = vsub.f32 1.0, %v1065
        %v1067 = vmul.f32 %v1064, %v1066
        %v1068 = vadd.f32 %v1064, %v1067
        %vm1069 = vweird.f32 %v972
        %vm1070 = vweird.f32 %v1064
        %vm1071 = vmor %vm1069, %vm1070
        %v1072 = vsel %vm1071, %v1064, %v1068
        %v1073 = vand.u32 2147483647, %v972
        %vm1074 = vcmp.eq.f32.partialorder %v1073, 8.507059e+37
        %v1075 = vand.u32 %v972, 2147483648
        %v1076 = vor.u32 1.1754944e-38, %v1075
        %v1077 = vsel %vm1074, %v1076, %v1072
        %v1078 = vmul.f32 1.0, %v1077
        %v1079 = vrcp.pop %v973
        %v1080 = vmul.f32 %v973, %v1079
        %v1081 = vsub.f32 1.0, %v1080
        %v1082 = vmul.f32 %v1079, %v1081
        %v1083 = vadd.f32 %v1079, %v1082
        %vm1084 = vweird.f32 %v973
        %vm1085 = vweird.f32 %v1079
        %vm1086 = vmor %vm1084, %vm1085
        %v1087 = vsel %vm1086, %v1079, %v1083
        %v1088 = vand.u32 2147483647, %v973
        %vm1089 = vcmp.eq.f32.partialorder %v1088, 8.507059e+37
        %v1090 = vand.u32 %v973, 2147483648
        %v1091 = vor.u32 1.1754944e-38, %v1090
        %v1092 = vsel %vm1089, %v1091, %v1087
        %v1093 = vmul.f32 1.0, %v1092
        %v1094 = vmul.f32 %v934, %v988
        %v1095 = vmul.f32 %v935, %v1003
        %v1096 = vmul.f32 %v936, %v1018
        %v1097 = vmul.f32 %v937, %v1033
        %v1098 = vmul.f32 %v938, %v1048
        %v1099 = vmul.f32 %v939, %v1063
        %v1100 = vmul.f32 %v940, %v1078
        %v1101 = vmul.f32 %v941, %v1093
        %v1102 = vld [vmem:[%s5] sm:$0xff]
        %v1103 = vld [vmem:[%s5 + $0x8] sm:$0xff]
        %v1104 = vld [vmem:[%s5 + $0x10] sm:$0xff]
        %v1105 = vld [vmem:[%s5 + $0x18] sm:$0xff]
        %v1106 = vld [vmem:[%s9] sm:$0xff]
        %v1107 = vld [vmem:[%s9 + $0x8] sm:$0xff]
        %v1108 = vld [vmem:[%s9 + $0x10] sm:$0xff]
        %v1109 = vld [vmem:[%s9 + $0x18] sm:$0xff]
        %1111 = vset.pattern.permute.xlu0 0
        %1112 = vperm.xlu0 %1111, %v1106
        %v1113 = vpop.permute.xlu0 %1112
        %1116 = vset.pattern.permute.xlu0 0
        %1117 = vperm.xlu0 %1116, %v1107
        %v1118 = vpop.permute.xlu0 %1117
        %1121 = vset.pattern.permute.xlu0 0
        %1122 = vperm.xlu0 %1121, %v1108
        %v1123 = vpop.permute.xlu0 %1122
        %1126 = vset.pattern.permute.xlu0 0
        %1127 = vperm.xlu0 %1126, %v1109
        %v1128 = vpop.permute.xlu0 %1127
        %v1131 = vsel %vm651, %v1102, 0
        %v1134 = vsel %vm651, %v1103, 0
        %v1137 = vsel %vm651, %v1104, 0
        %v1140 = vsel %vm651, %v1105, 0
        %1142 = vmatpush.msra.mxu0 0.0
        %1143 = vmatpush.msra.mxu0 0.0
        %1144 = vmatpush.msra.mxu0 0.0
        %1145 = vmatpush.msra.mxu0 0.0
        %1146 = vmatpush.msra.mxu0 0.0
        %1147 = vmatpush.msra.mxu0 0.0
        %1148 = vmatpush.msra.mxu0 0.0
        %1149 = vmatpush.msra.mxu0 0.0
        %1150 = vmatpush.msra.mxu0 0.0
        %1151 = vmatpush.msra.mxu0 0.0
        %1152 = vmatpush.msra.mxu0 0.0
        %1153 = vmatpush.msra.mxu0 0.0
        %1154 = vmatpush.msra.mxu0 %v1100
        %1155 = vmatpush.msra.mxu0 %v1098
        %1156 = vmatpush.msra.mxu0 %v1096
        %1157 = vmatpush.msra.mxu0 %v1094
        %1158 = vmatmul.f32.gmra.mxu0 %v1131
        %v1159 = vpop.f32.mrf.mxu0
        %v1160 = vadd.f32 %v1113, %v1159
        %1161 = vmatmul.f32.gmra.mxu0 %v1134
        %v1162 = vpop.f32.mrf.mxu0
        %v1163 = vadd.f32 %v1118, %v1162
        %1164 = vmatmul.f32.gmra.mxu0 %v1137
        %v1165 = vpop.f32.mrf.mxu0
        %v1166 = vadd.f32 %v1123, %v1165
        %1167 = vmatmul.f32.gmra.mxu0 %v1140
        %v1168 = vpop.f32.mrf.mxu0
        %v1169 = vadd.f32 %v1128, %v1168
        %1170 = vdwg.mxu0
        %1171 = vmatpush.msra.mxu0 0.0
        %1172 = vmatpush.msra.mxu0 0.0
        %1173 = vmatpush.msra.mxu0 0.0
        %1174 = vmatpush.msra.mxu0 0.0
        %1175 = vmatpush.msra.mxu0 0.0
        %1176 = vmatpush.msra.mxu0 0.0
        %1177 = vmatpush.msra.mxu0 0.0
        %1178 = vmatpush.msra.mxu0 0.0
        %1179 = vmatpush.msra.mxu0 0.0
        %1180 = vmatpush.msra.mxu0 0.0
        %1181 = vmatpush.msra.mxu0 0.0
        %1182 = vmatpush.msra.mxu0 0.0
        %1183 = vmatpush.msra.mxu0 %v1101
        %1184 = vmatpush.msra.mxu0 %v1099
        %1185 = vmatpush.msra.mxu0 %v1097
        %1186 = vmatpush.msra.mxu0 %v1095
        %1187 = vmatmul.f32.gmra.mxu0 %v1131
        %v1188 = vpop.f32.mrf.mxu0
        %v1189 = vadd.f32 %v1113, %v1188
        %1190 = vmatmul.f32.gmra.mxu0 %v1134
        %v1191 = vpop.f32.mrf.mxu0
        %v1192 = vadd.f32 %v1118, %v1191
        %1193 = vmatmul.f32.gmra.mxu0 %v1137
        %v1194 = vpop.f32.mrf.mxu0
        %v1195 = vadd.f32 %v1123, %v1194
        %1196 = vmatmul.f32.gmra.mxu0 %v1140
        %v1197 = vpop.f32.mrf.mxu0
        %v1198 = vadd.f32 %v1128, %v1197
        %1199 = vdwg.mxu0
        %v1200 = vmul.f32 %v878, %v1160
        %v1201 = vmul.f32 %v907, %v1189
        %v1202 = vmul.f32 %v881, %v1163
        %v1203 = vmul.f32 %v910, %v1192
        %v1204 = vmul.f32 %v884, %v1166
        %v1205 = vmul.f32 %v913, %v1195
        %v1206 = vmul.f32 %v887, %v1169
        %v1207 = vmul.f32 %v916, %v1198
        %v1208 = vadd.f32 %v447, %v1200
        %v1209 = vadd.f32 %v448, %v1201
        %v1210 = vadd.f32 %v449, %v1202
        %v1211 = vadd.f32 %v450, %v1203
        %v1212 = vadd.f32 %v451, %v1204
        %v1213 = vadd.f32 %v452, %v1205
        %v1214 = vadd.f32 %v453, %v1206
        %v1215 = vadd.f32 %v454, %v1207
        %1216 = vst [vmem:[%s443] sm:$0xff] %v1208
        %1217 = vst [vmem:[%s443 + $0x8] sm:$0xff] %v1209
        %1218 = vst [vmem:[%s443 + $0x10] sm:$0xff] %v1210
        %1219 = vst [vmem:[%s443 + $0x18] sm:$0xff] %v1211
        %1220 = vst [vmem:[%s443 + $0x20] sm:$0xff] %v1212
        %1221 = vst [vmem:[%s443 + $0x28] sm:$0xff] %v1213
        %1222 = vst [vmem:[%s443 + $0x30] sm:$0xff] %v1214
        %1223 = vst [vmem:[%s443 + $0x38] sm:$0xff] %v1215
        %s1224 = sand.u32 %s276, 1
        %s1225 = scalar_lea.sflag [#allocation4], %s1224
        %s1226 = sand.u32 %s276, 1
        %s1227 = smul.addr %s1226, 64
        %s1228 = scalar_lea.vmem [#allocation7], %s1227
        // Predicated region
        $region69: #{tpu_custom_call.1} parent=59 // pred_check
          %p1229 = pneg %p286
        $region70: #{tpu_custom_call.1} parent=59 // pred_check_branch
          %1231 = sbr.rel (%p1229) target = $region72
        $region71: #{tpu_custom_call.1} parent=59 // pred_region
          %s1232 = smul.u32 2, %s35
          %1234 = vsyncadd %s1225, 0
          %s1235 = smul.addr %s34, 8
          %s1236 = sadd.s32 %s1232, %s1235
          %s1237 = smul.addr %s1236, 8
          %s1238 = scalar_lea.hbm %s10, %s1237
          %s1239 = sshll.u32 %s1228, 4
          %s1240 = int_to_ptr.vmem [resolvable:$true] %s1239
          %s1241 = sshll.u32 %s1238, 4
          %s1242 = int_to_ptr.hbm [resolvable:$true] %s1241
          %1247 = dma.vmem_to_hbm [thread:$0]  %s1240, 1024, %s1242, %s1225, 256, 256, 16
        $region72: #{tpu_custom_call.1} parent=59 // pred_fallthru
          _
      $region60: #{tpu_custom_call.1} parent=5 // pred_fallthru
        _
      %p1248 = scmp.le.s32.totalorder 2, %s25
      // Predicated region
      $region73: #{tpu_custom_call.1} parent=5 // pred_check
        %p1249 = pneg %p1248
      $region74: #{tpu_custom_call.1} parent=5 // pred_check_branch
        %1251 = sbr.rel (%p1249) target = $region76
      $region75: #{tpu_custom_call.1} parent=5 // pred_region
        %s1252 = ssub.s32 %s25, 2
        // Predicated region
        $region77: #{tpu_custom_call.1} parent=75 // pred_check
          %p1253 = pneg %p292
        $region78: #{tpu_custom_call.1} parent=75 // pred_check_branch
          %1255 = sbr.rel (%p1253) target = $region80
        $region79: #{tpu_custom_call.1} parent=75 // pred_region
          %s1256 = sand.u32 %s277, 1
          %s1257 = scalar_lea.sflag [#allocation4], %s1256
          %s1258 = sand.u32 %s277, 1
          %s1259 = smul.addr %s1258, 64
          %s1260 = scalar_lea.vmem [#allocation7], %s1259
          %1262 = dma.done %s1257, 1024
        $region80: #{tpu_custom_call.1} parent=75 // pred_fallthru
          _
      $region76: #{tpu_custom_call.1} parent=5 // pred_fallthru
        _
    $region6: #{tpu_custom_call.1} parent=1 // loop_footer
      %s29 = sadd.s32 1, %s25
    $region7: #{tpu_custom_call.1} parent=1 // loop_footer_branch
      %24 = sbr.rel target = $region3
    $region8: #{tpu_custom_call.1} parent=1 // loop_exit
      _
    %1263 = vsyncpa [#allocation3], 1
    %s1264 = scalar_lea.sflag [#allocation3], 1
    %1265 = vsyncpa %s1264, 1
    %1266 = vsyncpa [#allocation6], 1
    %s1267 = scalar_lea.sflag [#allocation6], 1
    %1268 = vsyncpa %s1267, 1
    %1269 = vsyncpa [#allocation4], 1
    %s1270 = scalar_lea.sflag [#allocation4], 1
    %1271 = vsyncpa %s1270, 1

</llo_original>
